<compile_context>
chip_gen: v5e
topology: v5e:2x2
jax: 0.10.0
libtpu: 0.0.40
codegen_flags: <defaults>
</compile_context>

<pallas_src>
import functools
import math

import jax
import jax.numpy as jnp
from jax import lax
from jax.experimental import pallas as pl
from jax.experimental.pallas import tpu as pltpu

# ------------------------------------------------------------------
# FSQ constants (vocab_size=4096 -> levels=[8,8,8,8]), eps = 1e-3.
# All levels are equal, so per-channel constants collapse to Python scalars.
# ------------------------------------------------------------------
LEVELS = [8, 8, 8, 8]
VQ_DIM = len(LEVELS)
EMBED_DIM = 6
EPS = 1e-3

HALF_L = (LEVELS[0] - 1) * (1.0 - EPS) / 2.0      # 3.4965
OFFSET = 0.5                                      # levels are even
SHIFT = math.tan(OFFSET / HALF_L)                 # tan(0.5 / 3.4965)
HALF_W = float(LEVELS[0] // 2)                    # 4.0


def _fsq_kernel(x_ref, w_in_ref, b_in_ref, w_out_ref, b_out_ref,
                out_ref, loss_ref, *, valid_s, accumulate_loss):
    """One (batch-block, spatial-tile) step, channel-major.

    x_ref:     (BB, EMBED_DIM, TS)  input block (any float dtype)
    w_in_ref:  (VQ_DIM, EMBED_DIM)  proj_in weight (torch (out,in) layout), f32
    b_in_ref:  (VQ_DIM, 1)          proj_in bias with FSQ `shift` folded in
    w_out_ref: (EMBED_DIM, VQ_DIM)  proj_out weight pre-divided by half_width
    b_out_ref: (EMBED_DIM, 1)       proj_out bias
    out_ref:   (BB, EMBED_DIM, TS)  output block, written in the input dtype
    loss_ref:  (1, 1, 8, 128)       per batch-block loss accumulator
                                    (or per-step partial if not accumulating)
    """
    si = pl.program_id(1)
    bb, _, ts = x_ref.shape

    # Upcast in-register; HBM traffic stays in the input dtype (bf16-friendly).
    x = x_ref[...].astype(jnp.float32)                 # (BB, 6, TS)
    w_in = w_in_ref[...]                                # (4, 6)
    w_out = w_out_ref[...]                              # (6, 4) (pre /half_w)

    # proj_in as VPU broadcast-FMAs (K=6 is far too small for the MXU).
    h = jnp.broadcast_to(b_in_ref[...][None, :, :], (bb, VQ_DIM, ts))
    for d in range(EMBED_DIM):
        h = h + w_in[:, d:d + 1][None, :, :] * x[:, d:d + 1, :]

    # bound(): tanh(z + shift) * half_l - offset  (shift already in the bias)
    z = jnp.tanh(h) * HALF_L - OFFSET
    # round_ste forward == round (half-to-even, same as torch.round)
    q = jnp.round(z)

    diff = q - z
    dsq = diff * diff
    if valid_s is not None:
        # Padded spatial lanes must not contribute to the loss.
        lane = lax.broadcasted_iota(jnp.int32, dsq.shape, 2)
        dsq = jnp.where(si * ts + lane < valid_s, dsq, 0.0)

    part = jnp.broadcast_to(jnp.sum(dsq).reshape(1, 1, 1, 1), loss_ref.shape)
    if accumulate_loss:
        # Loss block is resident across the (arbitrary) spatial axis.
        @pl.when(si == 0)
        def _init():
            loss_ref[...] = jnp.zeros_like(loss_ref)
        loss_ref[...] += part
    else:
        loss_ref[...] = part

    # proj_out (weights pre-scaled by 1/half_width, so q is used directly).
    out = jnp.broadcast_to(b_out_ref[...][None, :, :], (bb, EMBED_DIM, ts))
    for k in range(VQ_DIM):
        out = out + w_out[:, k:k + 1][None, :, :] * q[:, k:k + 1, :]
    out_ref[...] = out.astype(out_ref.dtype)


def _choose_spatial_tile(s, max_tile_lanes=32768):
    """Return (tile, padded_s): tile is a multiple of 128 that divides padded_s."""
    s128 = ((s + 127) // 128) * 128
    cap = max(128, (max_tile_lanes // 128) * 128)
    if s128 <= cap:
        return s128, s128
    # Prefer a large multiple-of-128 divisor of the 128-padded size (no extra pad).
    t = cap
    while t >= 2048:
        if s128 % t == 0:
            return t, s128
        t -= 128
    # Awkward S: pad up to a multiple of the cap so blocks stay lane-dense & big.
    return cap, ((s + cap - 1) // cap) * cap


def _choose_batch_block(batch, ts, lane_budget=65536):
    """Largest divisor of `batch` with bb*ts <= lane_budget; prefer >=2 batch blocks."""
    cap = max(1, lane_budget // ts)
    divs = [d for d in range(1, batch + 1) if batch % d == 0 and d <= cap]
    bb = max(divs) if divs else 1
    # Keep >=2 blocks on the parallel batch axis so both v7x TensorCores get
    # work (worst case this halves the block size, which is cheap vs idling a core).
    if batch // bb < 2:
        smaller = [d for d in divs if batch // d >= 2]
        if smaller:
            bb = max(smaller)
    return bb


def rot_fsq_forward(h_in, w_in, b_in, w_out, b_out, *,
                    max_tile_lanes=32768, lane_budget=65536):
    """Eval-mode forward of RotFSQ.

    h_in:  (B, D, W, H) float (f32 or bf16), NCHW like the PyTorch module.
    w_in:  (VQ_DIM, EMBED_DIM)  proj_in.weight  (torch (out, in) layout)
    b_in:  (VQ_DIM,)            proj_in.bias
    w_out: (EMBED_DIM, VQ_DIM)  proj_out.weight
    b_out: (EMBED_DIM,)         proj_out.bias
    Returns (z_q, codebook_usage, codebook_usage_var, vq_loss, 0.25*vq_loss, 0.0)
    """
    B, D, W, H = h_in.shape
    assert D == EMBED_DIM, f"expected embedding_dim={EMBED_DIM}, got {D}"
    S = W * H

    # NCHW is already channel-major: (B, D, S) is a free re-view; dtype untouched.
    x = h_in.reshape(B, D, S)

    ts, s_pad = _choose_spatial_tile(S, max_tile_lanes)
    if s_pad != S:
        # One extra HBM pass, only for awkward (non multiple-of-128/tile) S.
        x = jnp.pad(x, ((0, 0), (0, 0), (0, s_pad - S)))
    n_s = s_pad // ts

    bb = _choose_batch_block(B, ts, lane_budget)
    nb = B // bb

    # If there is only one batch block, keep the spatial axis "parallel" (v7x
    # megacore) and emit per-block loss partials; otherwise accumulate the loss
    # across the "arbitrary" spatial axis.
    spatial_parallel = (nb == 1 and n_s > 1)
    accumulate_loss = not spatial_parallel
    n_loss = 1 if accumulate_loss else n_s

    # Fold FSQ constants into the affine params (exact: q is rounded before the
    # 1/half_width scale is applied).
    w_in_f = w_in.astype(jnp.float32)
    b_in_f = (b_in.astype(jnp.float32) + SHIFT).reshape(VQ_DIM, 1)
    w_out_f = w_out.astype(jnp.float32) / HALF_W
    b_out_f = b_out.astype(jnp.float32).reshape(EMBED_DIM, 1)

    kernel = functools.partial(
        _fsq_kernel,
        valid_s=S if s_pad != S else None,
        accumulate_loss=accumulate_loss)

    if accumulate_loss:
        loss_map = lambda bi, si: (bi, 0, 0, 0)
    else:
        loss_map = lambda bi, si: (bi, si, 0, 0)

    out, loss_part = pl.pallas_call(
        kernel,
        grid=(nb, n_s),
        in_specs=[
            pl.BlockSpec((bb, EMBED_DIM, ts), lambda bi, si: (bi, 0, si)),
            pl.BlockSpec((VQ_DIM, EMBED_DIM), lambda bi, si: (0, 0)),
            pl.BlockSpec((VQ_DIM, 1), lambda bi, si: (0, 0)),
            pl.BlockSpec((EMBED_DIM, VQ_DIM), lambda bi, si: (0, 0)),
            pl.BlockSpec((EMBED_DIM, 1), lambda bi, si: (0, 0)),
        ],
        out_specs=[
            pl.BlockSpec((bb, EMBED_DIM, ts), lambda bi, si: (bi, 0, si)),
            pl.BlockSpec((1, 1, 8, 128), loss_map),
        ],
        out_shape=[
            jax.ShapeDtypeStruct((B, EMBED_DIM, s_pad), h_in.dtype),
            jax.ShapeDtypeStruct((nb, n_loss, 8, 128), jnp.float32),
        ],
        compiler_params=pltpu.CompilerParams(
            dimension_semantics=(
                "parallel", "parallel" if spatial_parallel else "arbitrary"),
            vmem_limit_bytes=32 * 1024 * 1024),
    )(x, w_in_f, b_in_f, w_out_f, b_out_f)

    vq_loss = jnp.sum(loss_part[:, :, 0, 0]) / (B * S * VQ_DIM)

    if s_pad != S:
        out = out[:, :, :S]
    z_q = out.reshape(B, D, W, H)

    # Eval mode: usage stats are zero.
    # TODO(synk): training-only branch (bincount / EMA vocab hits /
    #             torch.distributed all_reduce) has no clean Pallas equivalent.
    return z_q, 0.0, 0.0, vq_loss, 0.25 * vq_loss, 0.0


def _reference_forward(h_in, w_in, b_in, w_out, b_out):
    """Pure-JAX reference mirroring the PyTorch forward (eval mode), in f32."""
    B, D, W, H = h_in.shape
    x = jnp.transpose(h_in.astype(jnp.float32), (0, 2, 3, 1)).reshape(B * W * H, D)
    h = jnp.dot(x, w_in.T, precision=lax.Precision.HIGHEST) + b_in
    z = jnp.tanh(h + SHIFT) * HALF_L - OFFSET
    q = jnp.round(z)
    vq_loss = jnp.mean((q - z) ** 2)
    zq = q / HALF_W
    out = jnp.dot(zq, w_out.T, precision=lax.Precision.HIGHEST) + b_out
    z_q = out.reshape(B, W, H, D).transpose(0, 3, 1, 2)
    return z_q, vq_loss


if __name__ == "__main__":
    key = jax.random.PRNGKey(0)
    k_x, k_wi, k_bi, k_wo, k_bo = jax.random.split(key, 5)

    # proj_in / proj_out parameters in the torch (out_features, in_features) layout.
    w_in = jax.random.normal(k_wi, (VQ_DIM, EMBED_DIM), dtype=jnp.float32) * 0.3
    b_in = jax.random.normal(k_bi, (VQ_DIM,), dtype=jnp.float32) * 0.05
    w_out = jax.random.normal(k_wo, (EMBED_DIM, VQ_DIM), dtype=jnp.float32) * 0.3
    b_out = jax.random.normal(k_bo, (EMBED_DIM,), dtype=jnp.float32) * 0.05

    def run_case(case_id, B, Wd, Hd, dtype, atol_zq, **kwargs):
        kx = jax.random.fold_in(k_x, case_id)
        h_in = jax.random.normal(
            kx, (B, EMBED_DIM, Wd, Hd), dtype=jnp.float32).astype(dtype)
        z_q, usage, usage_var, vq_loss, commit, zero = rot_fsq_forward(
            h_in, w_in, b_in, w_out, b_out, **kwargs)
        jax.block_until_ready(z_q)
        jax.block_until_ready(vq_loss)

        z_q_ref, vq_loss_ref = _reference_forward(h_in, w_in, b_in, w_out, b_out)
        assert z_q.shape == (B, EMBED_DIM, Wd, Hd), f"case {case_id}: shape"
        assert z_q.dtype == h_in.dtype, f"case {case_id}: dtype"
        assert jnp.allclose(z_q.astype(jnp.float32), z_q_ref, atol=atol_zq), \
            f"case {case_id}: z_q mismatch"
        assert jnp.allclose(vq_loss, vq_loss_ref, atol=1e-5), \
            f"case {case_id}: vq_loss mismatch"
        assert jnp.allclose(commit, 0.25 * vq_loss), f"case {case_id}: commit"

    # 1) small NCHW image batch, f32 (single spatial tile, batch-blocked grid)
    run_case(1, 2, 16, 16, jnp.float32, 1e-4)
    # 2) spatial size not a multiple of 128 -> padded input + loss lane-masking
    run_case(2, 2, 20, 20, jnp.float32, 1e-4)
    # 3) multi spatial tile + multi batch block (exercises the loss accumulator)
    run_case(3, 4, 32, 32, jnp.float32, 1e-4,
             max_tile_lanes=512, lane_budget=1024)
    # 4) bf16 activations kept narrow end-to-end (bf16 in HBM, f32 in-register)
    run_case(4, 2, 16, 16, jnp.bfloat16, 2e-2)

    print("KERNEL_OK")
</pallas_src>

<mosaic_0001>
module attributes {stable_mosaic.version = 11 : i64} {
  func.func @_fsq_kernel(%arg0: i32, %arg1: i32, %arg2: memref<1x6x256xf32, #tpu.memory_space<vmem>>, %arg3: memref<4x6xf32, #tpu.memory_space<vmem>>, %arg4: memref<4x1xf32, #tpu.memory_space<vmem>>, %arg5: memref<6x4xf32, #tpu.memory_space<vmem>>, %arg6: memref<6x1xf32, #tpu.memory_space<vmem>>, %arg7: memref<1x6x256xf32, #tpu.memory_space<vmem>>, %arg8: memref<1x1x8x128xf32, #tpu.memory_space<vmem>>) attributes {dimension_semantics = [#tpu.dimension_semantics<parallel>, #tpu.dimension_semantics<arbitrary>], iteration_bounds = array<i64: 2, 1>, scalar_prefetch = 0 : i64, scratch_operands = 0 : i64, tpu.core_type = #tpu.core_type<tc>, window_params = [{transform_indices = @transform_0, window_bounds = array<i64: 1, 6, 256>}, {pipeline_mode = #tpu.pipeline_mode<synchronous>, transform_indices = @transform_1, window_bounds = array<i64: 4, 6>}, {pipeline_mode = #tpu.pipeline_mode<synchronous>, transform_indices = @transform_2, window_bounds = array<i64: 4, 1>}, {pipeline_mode = #tpu.pipeline_mode<synchronous>, transform_indices = @transform_3, window_bounds = array<i64: 6, 4>}, {pipeline_mode = #tpu.pipeline_mode<synchronous>, transform_indices = @transform_4, window_bounds = array<i64: 6, 1>}, {transform_indices = @transform_5, window_bounds = array<i64: 1, 6, 256>}, {transform_indices = @transform_6, window_bounds = array<i64: 1, 1, 8, 128>}]} {
    %c0 = arith.constant 0 : index
    %c0_0 = arith.constant 0 : index
    %c0_1 = arith.constant 0 : index
    %0 = vector.load %arg2[%c0, %c0_0, %c0_1] : memref<1x6x256xf32, #tpu.memory_space<vmem>>, vector<1x6x256xf32>
    %c0_2 = arith.constant 0 : index
    %c0_3 = arith.constant 0 : index
    %1 = vector.load %arg3[%c0_2, %c0_3] : memref<4x6xf32, #tpu.memory_space<vmem>>, vector<4x6xf32>
    %c0_4 = arith.constant 0 : index
    %c0_5 = arith.constant 0 : index
    %2 = vector.load %arg5[%c0_4, %c0_5] : memref<6x4xf32, #tpu.memory_space<vmem>>, vector<6x4xf32>
    %c0_6 = arith.constant 0 : index
    %c0_7 = arith.constant 0 : index
    %3 = vector.load %arg4[%c0_6, %c0_7] : memref<4x1xf32, #tpu.memory_space<vmem>>, vector<4x1xf32>
    %4 = vector.shape_cast %3 : vector<4x1xf32> to vector<1x4x1xf32>
    %5 = vector.shape_cast %4 : vector<1x4x1xf32> to vector<1x4x1xf32>
    %6 = vector.broadcast %5 : vector<1x4x1xf32> to vector<1x4x256xf32>
    %7 = vector.extract_strided_slice %1 {offsets = [0, 0], sizes = [4, 1], strides = [1, 1]} : vector<4x6xf32> to vector<4x1xf32>
    %8 = vector.shape_cast %7 : vector<4x1xf32> to vector<1x4x1xf32>
    %9 = vector.extract_strided_slice %0 {offsets = [0, 0, 0], sizes = [1, 1, 256], strides = [1, 1, 1]} : vector<1x6x256xf32> to vector<1x1x256xf32>
    %10 = vector.broadcast %8 : vector<1x4x1xf32> to vector<1x4x256xf32>
    %11 = vector.broadcast %9 : vector<1x1x256xf32> to vector<1x4x256xf32>
    %12 = arith.mulf %10, %11 : vector<1x4x256xf32>
    %13 = arith.addf %6, %12 : vector<1x4x256xf32>
    %14 = vector.extract_strided_slice %1 {offsets = [0, 1], sizes = [4, 1], strides = [1, 1]} : vector<4x6xf32> to vector<4x1xf32>
    %15 = vector.shape_cast %14 : vector<4x1xf32> to vector<1x4x1xf32>
    %16 = vector.extract_strided_slice %0 {offsets = [0, 1, 0], sizes = [1, 1, 256], strides = [1, 1, 1]} : vector<1x6x256xf32> to vector<1x1x256xf32>
    %17 = vector.broadcast %15 : vector<1x4x1xf32> to vector<1x4x256xf32>
    %18 = vector.broadcast %16 : vector<1x1x256xf32> to vector<1x4x256xf32>
    %19 = arith.mulf %17, %18 : vector<1x4x256xf32>
    %20 = arith.addf %13, %19 : vector<1x4x256xf32>
    %21 = vector.extract_strided_slice %1 {offsets = [0, 2], sizes = [4, 1], strides = [1, 1]} : vector<4x6xf32> to vector<4x1xf32>
    %22 = vector.shape_cast %21 : vector<4x1xf32> to vector<1x4x1xf32>
    %23 = vector.extract_strided_slice %0 {offsets = [0, 2, 0], sizes = [1, 1, 256], strides = [1, 1, 1]} : vector<1x6x256xf32> to vector<1x1x256xf32>
    %24 = vector.broadcast %22 : vector<1x4x1xf32> to vector<1x4x256xf32>
    %25 = vector.broadcast %23 : vector<1x1x256xf32> to vector<1x4x256xf32>
    %26 = arith.mulf %24, %25 : vector<1x4x256xf32>
    %27 = arith.addf %20, %26 : vector<1x4x256xf32>
    %28 = vector.extract_strided_slice %1 {offsets = [0, 3], sizes = [4, 1], strides = [1, 1]} : vector<4x6xf32> to vector<4x1xf32>
    %29 = vector.shape_cast %28 : vector<4x1xf32> to vector<1x4x1xf32>
    %30 = vector.extract_strided_slice %0 {offsets = [0, 3, 0], sizes = [1, 1, 256], strides = [1, 1, 1]} : vector<1x6x256xf32> to vector<1x1x256xf32>
    %31 = vector.broadcast %29 : vector<1x4x1xf32> to vector<1x4x256xf32>
    %32 = vector.broadcast %30 : vector<1x1x256xf32> to vector<1x4x256xf32>
    %33 = arith.mulf %31, %32 : vector<1x4x256xf32>
    %34 = arith.addf %27, %33 : vector<1x4x256xf32>
    %35 = vector.extract_strided_slice %1 {offsets = [0, 4], sizes = [4, 1], strides = [1, 1]} : vector<4x6xf32> to vector<4x1xf32>
    %36 = vector.shape_cast %35 : vector<4x1xf32> to vector<1x4x1xf32>
    %37 = vector.extract_strided_slice %0 {offsets = [0, 4, 0], sizes = [1, 1, 256], strides = [1, 1, 1]} : vector<1x6x256xf32> to vector<1x1x256xf32>
    %38 = vector.broadcast %36 : vector<1x4x1xf32> to vector<1x4x256xf32>
    %39 = vector.broadcast %37 : vector<1x1x256xf32> to vector<1x4x256xf32>
    %40 = arith.mulf %38, %39 : vector<1x4x256xf32>
    %41 = arith.addf %34, %40 : vector<1x4x256xf32>
    %42 = vector.extract_strided_slice %1 {offsets = [0, 5], sizes = [4, 1], strides = [1, 1]} : vector<4x6xf32> to vector<4x1xf32>
    %43 = vector.shape_cast %42 : vector<4x1xf32> to vector<1x4x1xf32>
    %44 = vector.extract_strided_slice %0 {offsets = [0, 5, 0], sizes = [1, 1, 256], strides = [1, 1, 1]} : vector<1x6x256xf32> to vector<1x1x256xf32>
    %45 = vector.broadcast %43 : vector<1x4x1xf32> to vector<1x4x256xf32>
    %46 = vector.broadcast %44 : vector<1x1x256xf32> to vector<1x4x256xf32>
    %47 = arith.mulf %45, %46 : vector<1x4x256xf32>
    %48 = arith.addf %41, %47 : vector<1x4x256xf32>
    %49 = math.tanh %48 : vector<1x4x256xf32>
    %cst = arith.constant 3.496500e+00 : f32
    %50 = vector.broadcast %cst : f32 to vector<1x4x256xf32>
    %51 = arith.mulf %49, %50 : vector<1x4x256xf32>
    %cst_8 = arith.constant 5.000000e-01 : f32
    %52 = vector.broadcast %cst_8 : f32 to vector<1x4x256xf32>
    %53 = arith.subf %51, %52 : vector<1x4x256xf32>
    %54 = math.roundeven %53 : vector<1x4x256xf32>
    %55 = arith.subf %54, %53 : vector<1x4x256xf32>
    %56 = arith.mulf %55, %55 : vector<1x4x256xf32>
    %57 = vector.shape_cast %56 : vector<1x4x256xf32> to vector<1x1x4x256xf32>
    %cst_9 = arith.constant dense<0.000000e+00> : vector<1xf32>
    %58 = vector.multi_reduction <add>, %57, %cst_9 [1, 2, 3] : vector<1x1x4x256xf32> to vector<1xf32>
    %59 = vector.shape_cast %58 : vector<1xf32> to vector<1x1x1x1xf32>
    %60 = vector.extract %59[0, 0, 0, 0] : f32 from vector<1x1x1x1xf32>
    %61 = vector.broadcast %60 : f32 to vector<1x1x1x1xf32>
    %62 = vector.shape_cast %61 : vector<1x1x1x1xf32> to vector<1x1x1x1xf32>
    %63 = vector.broadcast %62 : vector<1x1x1x1xf32> to vector<1x1x8x128xf32>
    %c0_i32 = arith.constant 0 : i32
    %64 = arith.cmpi eq, %arg1, %c0_i32 : i32
    %65 = arith.extui %64 : i1 to i32
    %c0_i32_10 = arith.constant 0 : i32
    %66 = arith.cmpi ne, %65, %c0_i32_10 : i32
    scf.if %66 {
      %cst_24 = arith.constant 0.000000e+00 : f32
      %103 = vector.broadcast %cst_24 : f32 to vector<1x1x8x128xf32>
      %c0_25 = arith.constant 0 : index
      %c0_26 = arith.constant 0 : index
      %c0_27 = arith.constant 0 : index
      %c0_28 = arith.constant 0 : index
      %104 = vector.load %arg8[%c0_25, %c0_26, %c0_27, %c0_28] : memref<1x1x8x128xf32, #tpu.memory_space<vmem>>, vector<1x1x8x128xf32>
      tpu.vector_store %arg8[%c0_25, %c0_26, %c0_27, %c0_28], %103 {strides = array<i32>} : memref<1x1x8x128xf32, #tpu.memory_space<vmem>>, vector<1x1x8x128xf32>,
    } else {
    }
    %c0_11 = arith.constant 0 : index
    %c0_12 = arith.constant 0 : index
    %c0_13 = arith.constant 0 : index
    %c0_14 = arith.constant 0 : index
    %67 = vector.load %arg8[%c0_11, %c0_12, %c0_13, %c0_14] : memref<1x1x8x128xf32, #tpu.memory_space<vmem>>, vector<1x1x8x128xf32>
    %68 = arith.addf %67, %63 : vector<1x1x8x128xf32>
    %c0_15 = arith.constant 0 : index
    %c0_16 = arith.constant 0 : index
    %c0_17 = arith.constant 0 : index
    %c0_18 = arith.constant 0 : index
    %69 = vector.load %arg8[%c0_15, %c0_16, %c0_17, %c0_18] : memref<1x1x8x128xf32, #tpu.memory_space<vmem>>, vector<1x1x8x128xf32>
    tpu.vector_store %arg8[%c0_15, %c0_16, %c0_17, %c0_18], %68 {strides = array<i32>} : memref<1x1x8x128xf32, #tpu.memory_space<vmem>>, vector<1x1x8x128xf32>,
    %c0_19 = arith.constant 0 : index
    %c0_20 = arith.constant 0 : index
    %70 = vector.load %arg6[%c0_19, %c0_20] : memref<6x1xf32, #tpu.memory_space<vmem>>, vector<6x1xf32>
    %71 = vector.shape_cast %70 : vector<6x1xf32> to vector<1x6x1xf32>
    %72 = vector.shape_cast %71 : vector<1x6x1xf32> to vector<1x6x1xf32>
    %73 = vector.broadcast %72 : vector<1x6x1xf32> to vector<1x6x256xf32>
    %74 = vector.extract_strided_slice %2 {offsets = [0, 0], sizes = [6, 1], strides = [1, 1]} : vector<6x4xf32> to vector<6x1xf32>
    %75 = vector.shape_cast %74 : vector<6x1xf32> to vector<1x6x1xf32>
    %76 = vector.extract_strided_slice %54 {offsets = [0, 0, 0], sizes = [1, 1, 256], strides = [1, 1, 1]} : vector<1x4x256xf32> to vector<1x1x256xf32>
    %77 = vector.broadcast %75 : vector<1x6x1xf32> to vector<1x6x256xf32>
    %78 = vector.broadcast %76 : vector<1x1x256xf32> to vector<1x6x256xf32>
    %79 = arith.mulf %77, %78 : vector<1x6x256xf32>
    %80 = arith.addf %73, %79 : vector<1x6x256xf32>
    %81 = vector.extract_strided_slice %2 {offsets = [0, 1], sizes = [6, 1], strides = [1, 1]} : vector<6x4xf32> to vector<6x1xf32>
    %82 = vector.shape_cast %81 : vector<6x1xf32> to vector<1x6x1xf32>
    %83 = vector.extract_strided_slice %54 {offsets = [0, 1, 0], sizes = [1, 1, 256], strides = [1, 1, 1]} : vector<1x4x256xf32> to vector<1x1x256xf32>
    %84 = vector.broadcast %82 : vector<1x6x1xf32> to vector<1x6x256xf32>
    %85 = vector.broadcast %83 : vector<1x1x256xf32> to vector<1x6x256xf32>
    %86 = arith.mulf %84, %85 : vector<1x6x256xf32>
    %87 = arith.addf %80, %86 : vector<1x6x256xf32>
    %88 = vector.extract_strided_slice %2 {offsets = [0, 2], sizes = [6, 1], strides = [1, 1]} : vector<6x4xf32> to vector<6x1xf32>
    %89 = vector.shape_cast %88 : vector<6x1xf32> to vector<1x6x1xf32>
    %90 = vector.extract_strided_slice %54 {offsets = [0, 2, 0], sizes = [1, 1, 256], strides = [1, 1, 1]} : vector<1x4x256xf32> to vector<1x1x256xf32>
    %91 = vector.broadcast %89 : vector<1x6x1xf32> to vector<1x6x256xf32>
    %92 = vector.broadcast %90 : vector<1x1x256xf32> to vector<1x6x256xf32>
    %93 = arith.mulf %91, %92 : vector<1x6x256xf32>
    %94 = arith.addf %87, %93 : vector<1x6x256xf32>
    %95 = vector.extract_strided_slice %2 {offsets = [0, 3], sizes = [6, 1], strides = [1, 1]} : vector<6x4xf32> to vector<6x1xf32>
    %96 = vector.shape_cast %95 : vector<6x1xf32> to vector<1x6x1xf32>
    %97 = vector.extract_strided_slice %54 {offsets = [0, 3, 0], sizes = [1, 1, 256], strides = [1, 1, 1]} : vector<1x4x256xf32> to vector<1x1x256xf32>
    %98 = vector.broadcast %96 : vector<1x6x1xf32> to vector<1x6x256xf32>
    %99 = vector.broadcast %97 : vector<1x1x256xf32> to vector<1x6x256xf32>
    %100 = arith.mulf %98, %99 : vector<1x6x256xf32>
    %101 = arith.addf %94, %100 : vector<1x6x256xf32>
    %c0_21 = arith.constant 0 : index
    %c0_22 = arith.constant 0 : index
    %c0_23 = arith.constant 0 : index
    %102 = vector.load %arg7[%c0_21, %c0_22, %c0_23] : memref<1x6x256xf32, #tpu.memory_space<vmem>>, vector<1x6x256xf32>
    tpu.vector_store %arg7[%c0_21, %c0_22, %c0_23], %101 {strides = array<i32>} : memref<1x6x256xf32, #tpu.memory_space<vmem>>, vector<1x6x256xf32>,
    return
  }
  func.func @transform_0(%arg0: i32, %arg1: i32) -> (i32, i32, i32) {
    %c0_i32 = arith.constant 0 : i32
    %c0_i32_0 = arith.constant 0 : i32
    return %arg0, %c0_i32, %arg1 : i32, i32, i32
  }
  func.func @transform_1(%arg0: i32, %arg1: i32) -> (i32, i32) {
    %c0_i32 = arith.constant 0 : i32
    %c0_i32_0 = arith.constant 0 : i32
    %c0_i32_1 = arith.constant 0 : i32
    return %c0_i32, %c0_i32_0 : i32, i32
  }
  func.func @transform_2(%arg0: i32, %arg1: i32) -> (i32, i32) {
    %c0_i32 = arith.constant 0 : i32
    %c0_i32_0 = arith.constant 0 : i32
    %c0_i32_1 = arith.constant 0 : i32
    return %c0_i32, %c0_i32_0 : i32, i32
  }
  func.func @transform_3(%arg0: i32, %arg1: i32) -> (i32, i32) {
    %c0_i32 = arith.constant 0 : i32
    %c0_i32_0 = arith.constant 0 : i32
    %c0_i32_1 = arith.constant 0 : i32
    return %c0_i32, %c0_i32_0 : i32, i32
  }
  func.func @transform_4(%arg0: i32, %arg1: i32) -> (i32, i32) {
    %c0_i32 = arith.constant 0 : i32
    %c0_i32_0 = arith.constant 0 : i32
    %c0_i32_1 = arith.constant 0 : i32
    return %c0_i32, %c0_i32_0 : i32, i32
  }
  func.func @transform_5(%arg0: i32, %arg1: i32) -> (i32, i32, i32) {
    %c0_i32 = arith.constant 0 : i32
    %c0_i32_0 = arith.constant 0 : i32
    return %arg0, %c0_i32, %arg1 : i32, i32, i32
  }
  func.func @transform_6(%arg0: i32, %arg1: i32) -> (i32, i32, i32, i32) {
    %c0_i32 = arith.constant 0 : i32
    %c0_i32_0 = arith.constant 0 : i32
    %c0_i32_1 = arith.constant 0 : i32
    %c0_i32_2 = arith.constant 0 : i32
    return %arg0, %c0_i32, %c0_i32_0, %c0_i32_1 : i32, i32, i32, i32
  }
}

</mosaic_0001>

<llo_original>
// kernel: tpu_custom_call.1
$region0: #{tpu_custom_call.1}
  #allocation0 [shape = 'u32[]', space=smem, size = 0x4, offset = 0x4, fixed_abs, tag = 'smem constant byte address 0x4 - core index']
  #allocation1 [shape = 'u32[72,128]{1,0:T(1,128)}', space=vmem, size = 0x9000, scoped, tag = 'internal scratch']
  %s0 = inlined_call_operand.vmem [shape: f32[2,6,256], index: 0, kind: input, shape index: {}]
  %s1 = inlined_call_operand.vmem [shape: f32[4,6], index: 1, kind: input, shape index: {}]
  %s2 = inlined_call_operand.vmem [shape: f32[4,1], index: 2, kind: input, shape index: {}]
  %s3 = inlined_call_operand.vmem [shape: f32[6,4], index: 3, kind: input, shape index: {}]
  %s4 = inlined_call_operand.vmem [shape: f32[6,1], index: 4, kind: input, shape index: {}]
  %s5 = inlined_call_operand.vmem [shape: f32[2,6,256], index: 5, kind: output, shape index: {0}]
  %s6 = inlined_call_operand.hbm [shape: f32[2,1,8,128], index: 6, kind: output, shape index: {1}]
  %7 = xla_tuple %s5, %s6
  %s8 = sld [smem:[#allocation0]]
  $region65: #{tpu_custom_call.1} parent=0
    _
  %s10 = ssub.s32 1, %s8
  %s11 = scalar_select 0, %s10, %s8
  $region1: #{tpu_custom_call.1} parent=0
    #allocation2 [shape = 'u8[8192]{0}', space=vmem, size = 0x2000, scoped, tag = 'output window, operand 1']
    #allocation3 [shape = 's32[2]{0}', space=sflag, size = 0x8, scoped, tag = 'scoped memory for tpu_custom_call.1']
    %12 = vsyncpa [#allocation3], 0
    %s13 = scalar_lea.sflag [#allocation3], 1
    %14 = vsyncpa %s13, 0
    loop: start=0, step=1, limit=4
    $region2: #{tpu_custom_call.1} parent=1 // loop_pre_header
      _
    $region3: #{tpu_custom_call.1} parent=1 // loop_header
      %s16 = sphi 0, %s20
      %p17 = scmp.ge.s32.totalorder %s16, 4
      %s23 = sphi 0, %s35
      %s24 = sphi 0, %s31
      %s25 = sphi 0, %s23
      %s26 = sphi 0, %s24
      %s27 = sphi 0, %s25
      %s28 = sphi 0, %s26
      %s40 = sphi 0, %s42
      %s43 = sphi 0, %s40
      %s44 = sphi 0, %s43
      %s60 = sphi 0, %s44
      %s64 = sphi 0, %s64
      %s66 = sphi 0, %s64
      %s67 = sphi 0, %s66
      %s81 = sphi 0, %s67
      %s85 = sphi 0, %s85
      %s87 = sphi 0, %s85
      %s88 = sphi 0, %s87
      %s102 = sphi 0, %s88
      %s106 = sphi 0, %s106
      %s108 = sphi 0, %s106
      %s109 = sphi 0, %s108
      %s123 = sphi 0, %s109
      %s127 = sphi 0, %s127
      %s129 = sphi 0, %s127
      %s130 = sphi 0, %s129
      %s144 = sphi 0, %s130
      %s152 = sphi 0, %s154
      %s155 = sphi 0, %s152
      %s156 = sphi 0, %s155
      %s172 = sphi 0, %s156
      %s178 = sphi 0, %s180
      %s181 = sphi 0, %s178
      %s182 = sphi 0, %s181
      %s198 = sphi 0, %s182
    $region4: #{tpu_custom_call.1} parent=1 // loop_header_branch
      %19 = sbr.rel (%p17) target = $region8
    $region5: #{tpu_custom_call.1} parent=1 // loop_body
      %s21 = ssub.s32 %s16, 1
      %s22 = ssub.s32 %s16, 2
      %s29 = sadd.s32 1, %s24
      %p30 = scmp.ge.s32.totalorder %s29, 1
      %s31 = scalar_select %p30, 0, %s29
      %s32 = sadd.s32 1, %s23
      %s33 = scalar_select %p30, %s32, %s23
      %p34 = scmp.ge.s32.totalorder %s33, 2
      %s35 = scalar_select %p34, 0, %s33
      %s36 = ssub.s32 %s23, %s35
      %s37 = ssub.s32 %s24, %s31
      %s38 = sor.u32 %s36, %s37
      %p39 = scmp.eq.s32.totalorder %s38, 0
      %s41 = sadd.s32 %s40, 1
      %s42 = scalar_select %p39, %s40, %s41
      %p45 = pneg %p39
      %p46 = scmp.eq.s32.totalorder %s16, 1
      %p47 = por %p45, %p46
      %p48 = scmp.ne.s32.totalorder %s40, %s43
      %p49 = scmp.eq.s32.totalorder %s16, 0
      %p50 = por %p48, %p49
      %p51 = scmp.ne.s32.totalorder %s40, %s43
      %p52 = scmp.eq.s32.totalorder %s21, 1
      %p53 = por %p51, %p52
      %p54 = scmp.ne.s32.totalorder %s43, %s44
      %p55 = scmp.eq.s32.totalorder %s21, 0
      %p56 = por %p54, %p55
      %p57 = scmp.ne.s32.totalorder %s43, %s44
      %p58 = scmp.eq.s32.totalorder %s22, 1
      %p59 = por %p57, %p58
      %p61 = scmp.ne.s32.totalorder %s44, %s60
      %p62 = scmp.eq.s32.totalorder %s22, 0
      %p63 = por %p61, %p62
      %s65 = sadd.s32 %s64, 1
      %p68 = scmp.eq.s32.totalorder %s16, 1
      %p69 = scmp.ne.s32.totalorder %s64, %s66
      %p70 = scmp.eq.s32.totalorder %s16, 0
      %p71 = por %p69, %p70
      %p72 = scmp.ne.s32.totalorder %s64, %s66
      %p73 = scmp.eq.s32.totalorder %s21, 1
      %p74 = por %p72, %p73
      %p75 = scmp.ne.s32.totalorder %s66, %s67
      %p76 = scmp.eq.s32.totalorder %s21, 0
      %p77 = por %p75, %p76
      %p78 = scmp.ne.s32.totalorder %s66, %s67
      %p79 = scmp.eq.s32.totalorder %s22, 1
      %p80 = por %p78, %p79
      %p82 = scmp.ne.s32.totalorder %s67, %s81
      %p83 = scmp.eq.s32.totalorder %s22, 0
      %p84 = por %p82, %p83
      %s86 = sadd.s32 %s85, 1
      %p89 = scmp.eq.s32.totalorder %s16, 1
      %p90 = scmp.ne.s32.totalorder %s85, %s87
      %p91 = scmp.eq.s32.totalorder %s16, 0
      %p92 = por %p90, %p91
      %p93 = scmp.ne.s32.totalorder %s85, %s87
      %p94 = scmp.eq.s32.totalorder %s21, 1
      %p95 = por %p93, %p94
      %p96 = scmp.ne.s32.totalorder %s87, %s88
      %p97 = scmp.eq.s32.totalorder %s21, 0
      %p98 = por %p96, %p97
      %p99 = scmp.ne.s32.totalorder %s87, %s88
      %p100 = scmp.eq.s32.totalorder %s22, 1
      %p101 = por %p99, %p100
      %p103 = scmp.ne.s32.totalorder %s88, %s102
      %p104 = scmp.eq.s32.totalorder %s22, 0
      %p105 = por %p103, %p104
      %s107 = sadd.s32 %s106, 1
      %p110 = scmp.eq.s32.totalorder %s16, 1
      %p111 = scmp.ne.s32.totalorder %s106, %s108
      %p112 = scmp.eq.s32.totalorder %s16, 0
      %p113 = por %p111, %p112
      %p114 = scmp.ne.s32.totalorder %s106, %s108
      %p115 = scmp.eq.s32.totalorder %s21, 1
      %p116 = por %p114, %p115
      %p117 = scmp.ne.s32.totalorder %s108, %s109
      %p118 = scmp.eq.s32.totalorder %s21, 0
      %p119 = por %p117, %p118
      %p120 = scmp.ne.s32.totalorder %s108, %s109
      %p121 = scmp.eq.s32.totalorder %s22, 1
      %p122 = por %p120, %p121
      %p124 = scmp.ne.s32.totalorder %s109, %s123
      %p125 = scmp.eq.s32.totalorder %s22, 0
      %p126 = por %p124, %p125
      %s128 = sadd.s32 %s127, 1
      %p131 = scmp.eq.s32.totalorder %s16, 1
      %p132 = scmp.ne.s32.totalorder %s127, %s129
      %p133 = scmp.eq.s32.totalorder %s16, 0
      %p134 = por %p132, %p133
      %p135 = scmp.ne.s32.totalorder %s127, %s129
      %p136 = scmp.eq.s32.totalorder %s21, 1
      %p137 = por %p135, %p136
      %p138 = scmp.ne.s32.totalorder %s129, %s130
      %p139 = scmp.eq.s32.totalorder %s21, 0
      %p140 = por %p138, %p139
      %p141 = scmp.ne.s32.totalorder %s129, %s130
      %p142 = scmp.eq.s32.totalorder %s22, 1
      %p143 = por %p141, %p142
      %p145 = scmp.ne.s32.totalorder %s130, %s144
      %p146 = scmp.eq.s32.totalorder %s22, 0
      %p147 = por %p145, %p146
      %s148 = ssub.s32 %s23, %s35
      %s149 = ssub.s32 %s24, %s31
      %s150 = sor.u32 %s148, %s149
      %p151 = scmp.eq.s32.totalorder %s150, 0
      %s153 = sadd.s32 %s152, 1
      %s154 = scalar_select %p151, %s152, %s153
      %p157 = pneg %p151
      %p158 = scmp.eq.s32.totalorder %s16, 1
      %p159 = por %p157, %p158
      %p160 = scmp.ne.s32.totalorder %s152, %s155
      %p161 = scmp.eq.s32.totalorder %s16, 0
      %p162 = por %p160, %p161
      %p163 = scmp.ne.s32.totalorder %s152, %s155
      %p164 = scmp.eq.s32.totalorder %s21, 1
      %p165 = por %p163, %p164
      %p166 = scmp.ne.s32.totalorder %s155, %s156
      %p167 = scmp.eq.s32.totalorder %s21, 0
      %p168 = por %p166, %p167
      %p169 = scmp.ne.s32.totalorder %s155, %s156
      %p170 = scmp.eq.s32.totalorder %s22, 1
      %p171 = por %p169, %p170
      %p173 = scmp.ne.s32.totalorder %s156, %s172
      %p174 = scmp.eq.s32.totalorder %s22, 0
      %p175 = por %p173, %p174
      %s176 = ssub.s32 %s23, %s35
      %p177 = scmp.eq.s32.totalorder %s176, 0
      %s179 = sadd.s32 %s178, 1
      %s180 = scalar_select %p177, %s178, %s179
      %p183 = pneg %p177
      %p184 = scmp.eq.s32.totalorder %s16, 1
      %p185 = por %p183, %p184
      %p186 = scmp.ne.s32.totalorder %s178, %s181
      %p187 = scmp.eq.s32.totalorder %s16, 0
      %p188 = por %p186, %p187
      %p189 = scmp.ne.s32.totalorder %s178, %s181
      %p190 = scmp.eq.s32.totalorder %s21, 1
      %p191 = por %p189, %p190
      %p192 = scmp.ne.s32.totalorder %s181, %s182
      %p193 = scmp.eq.s32.totalorder %s21, 0
      %p194 = por %p192, %p193
      %p195 = scmp.ne.s32.totalorder %s181, %s182
      %p196 = scmp.eq.s32.totalorder %s22, 1
      %p197 = por %p195, %p196
      %p199 = scmp.ne.s32.totalorder %s182, %s198
      %p200 = scmp.eq.s32.totalorder %s22, 0
      %p201 = por %p199, %p200
      %p202 = scmp.le.s32.totalorder 1, %s16
      %p203 = scmp.lt.s32.totalorder %s16, 3
      %p204 = pnand %p202, %p203
      %p205 = pneg %p204
      // Predicated region
      $region9: #{tpu_custom_call.1} parent=5 // pred_check
        _
      $region10: #{tpu_custom_call.1} parent=5 // pred_check_branch
        %207 = sbr.rel (%p204) target = $region12
      $region11: #{tpu_custom_call.1} parent=5 // pred_region
        %s208 = ssub.s32 %s16, 1
        // Predicated region
        $region13: #{tpu_custom_call.1} parent=11 // pred_check
          %p209 = pneg %p77
        $region14: #{tpu_custom_call.1} parent=11 // pred_check_branch
          %211 = sbr.rel (%p209) target = $region16
        $region15: #{tpu_custom_call.1} parent=11 // pred_region
          _
        $region16: #{tpu_custom_call.1} parent=11 // pred_fallthru
          _
        // Predicated region
        $region17: #{tpu_custom_call.1} parent=11 // pred_check
          %p212 = pneg %p98
        $region18: #{tpu_custom_call.1} parent=11 // pred_check_branch
          %214 = sbr.rel (%p212) target = $region20
        $region19: #{tpu_custom_call.1} parent=11 // pred_region
          _
        $region20: #{tpu_custom_call.1} parent=11 // pred_fallthru
          _
        // Predicated region
        $region21: #{tpu_custom_call.1} parent=11 // pred_check
          %p215 = pneg %p119
        $region22: #{tpu_custom_call.1} parent=11 // pred_check_branch
          %217 = sbr.rel (%p215) target = $region24
        $region23: #{tpu_custom_call.1} parent=11 // pred_region
          _
        $region24: #{tpu_custom_call.1} parent=11 // pred_fallthru
          _
        // Predicated region
        $region25: #{tpu_custom_call.1} parent=11 // pred_check
          %p218 = pneg %p140
        $region26: #{tpu_custom_call.1} parent=11 // pred_check_branch
          %220 = sbr.rel (%p218) target = $region28
        $region27: #{tpu_custom_call.1} parent=11 // pred_region
          _
        $region28: #{tpu_custom_call.1} parent=11 // pred_fallthru
          _
      $region12: #{tpu_custom_call.1} parent=5 // pred_fallthru
        _
      %p221 = scmp.lt.s32.totalorder %s16, 2
      // Predicated region
      $region29: #{tpu_custom_call.1} parent=5 // pred_check
        %p222 = pneg %p221
      $region30: #{tpu_custom_call.1} parent=5 // pred_check_branch
        %224 = sbr.rel (%p222) target = $region32
      $region31: #{tpu_custom_call.1} parent=5 // pred_region
        // Predicated region
        $region33: #{tpu_custom_call.1} parent=31 // pred_check
          %p225 = pneg %p50
        $region34: #{tpu_custom_call.1} parent=31 // pred_check_branch
          %227 = sbr.rel (%p225) target = $region36
        $region35: #{tpu_custom_call.1} parent=31 // pred_region
          %s228 = smul.u32 2, %s24
          %p229 = scmp.lt.s32.totalorder %s23, 1
          %s230 = scalar_select %p229, %s23, 1
          %p231 = scmp.lt.s32.totalorder %s228, 1
          %s232 = scalar_select %p231, %s228, 1
          %s233 = smul.addr %s230, 2
          %s234 = sadd.s32 %s232, %s233
          %s235 = smul.addr %s234, 8
          %s236 = scalar_lea.vmem %s0, %s235
          %s237 = smul.u32 2, %s24
        $region36: #{tpu_custom_call.1} parent=31 // pred_fallthru
          _
      $region32: #{tpu_custom_call.1} parent=5 // pred_fallthru
        _
      %p238 = scmp.le.s32.totalorder 1, %s16
      %p239 = scmp.lt.s32.totalorder %s16, 3
      %p240 = pnand %p238, %p239
      %p241 = pneg %p240
      // Predicated region
      $region37: #{tpu_custom_call.1} parent=5 // pred_check
        _
      $region38: #{tpu_custom_call.1} parent=5 // pred_check_branch
        %243 = sbr.rel (%p240) target = $region40
      $region39: #{tpu_custom_call.1} parent=5 // pred_region
        %s244 = ssub.s32 %s16, 1
        %s245 = smul.u32 2, %s26
        %p246 = scmp.lt.s32.totalorder %s25, 1
        %s247 = scalar_select %p246, %s25, 1
        %p248 = scmp.lt.s32.totalorder %s245, 1
        %s249 = scalar_select %p248, %s245, 1
        %s250 = smul.addr %s247, 2
        %s251 = sadd.s32 %s249, %s250
        %s252 = smul.addr %s251, 8
        %s253 = scalar_lea.vmem %s0, %s252
        %p254 = pneg %p56
        %p255 = pneg %p53
        %p256 = pneg %p77
        %p257 = pneg %p74
        %p258 = pneg %p98
        %p259 = pneg %p95
        %p260 = pneg %p119
        %p261 = pneg %p116
        %p262 = pneg %p140
        %p263 = pneg %p137
        %p264 = pneg %p168
        %p265 = pneg %p165
        %s266 = smul.u32 2, %s26
        %p267 = scmp.lt.s32.totalorder %s25, 1
        %s268 = scalar_select %p267, %s25, 1
        %p269 = scmp.lt.s32.totalorder %s266, 1
        %s270 = scalar_select %p269, %s266, 1
        %s271 = smul.addr %s268, 2
        %s272 = sadd.s32 %s270, %s271
        %s273 = smul.addr %s272, 8
        %s274 = scalar_lea.vmem %s5, %s273
        %p275 = pneg %p194
        %p276 = pneg %p191
        %s277 = sand.u32 %s181, 1
        %s278 = scalar_lea.sflag [#allocation3], %s277
        %s279 = sand.u32 %s181, 1
        %s280 = smul.addr %s279, 8
        %s281 = scalar_lea.vmem [#allocation2], %s280
        %s282 = smul.u32 2, %s26
        %p283 = scmp.lt.s32.totalorder %s25, 1
        %s284 = scalar_select %p283, %s25, 1
        %p285 = scmp.lt.s32.totalorder %s282, 1
        %s286 = scalar_select %p285, %s282, 1
        %s287 = smul.addr %s284, 2
        %s288 = sadd.s32 %s286, %s287
        %s289 = smul.addr %s288, 8
        %s290 = scalar_lea.vmem %s0, %s289
        %s291 = smul.u32 2, %s26
        %s292 = smul.u32 2, %s26
        %p293 = scmp.lt.s32.totalorder %s25, 1
        %s294 = scalar_select %p293, %s25, 1
        %p295 = scmp.lt.s32.totalorder %s292, 1
        %s296 = scalar_select %p295, %s292, 1
        %s297 = smul.addr %s294, 2
        %s298 = sadd.s32 %s296, %s297
        %s299 = smul.addr %s298, 8
        %s300 = scalar_lea.vmem %s5, %s299
        %s301 = smul.u32 2, %s26
        %v302 = vld [vmem:[%s290] sm:$0x3f]
        %v303 = vld [vmem:[%s290 + $0x8] sm:$0x3f]
        %v304 = vld [vmem:[%s1] sm:$0xf]
        %v305 = vld [vmem:[%s3] sm:$0x3f]
        %v306 = vld [vmem:[%s2] sm:$0xf]
        %308 = vset.pattern.permute.xlu0 0
        %309 = vperm.xlu0 %308, %v306
        %v310 = vpop.permute.xlu0 %309
        %313 = vset.pattern.permute.xlu0 0
        %314 = vperm.xlu0 %313, %v304
        %v315 = vpop.permute.xlu0 %314
        %v317 = vperm.slane %v302, 0
        %v318 = vperm.slane %v303, 0
        %v319 = vmul.f32 %v315, %v317
        %v320 = vmul.f32 %v315, %v318
        %v321 = vadd.f32 %v310, %v319
        %v322 = vadd.f32 %v310, %v320
        %323 = vset.pattern.permute.xlu0 1
        %324 = vperm.xlu0 %323, %v304
        %v325 = vpop.permute.xlu0 %324
        %v327 = vperm.slane %v302, 1
        %v328 = vperm.slane %v303, 1
        %v329 = vmul.f32 %v325, %v327
        %v330 = vmul.f32 %v325, %v328
        %v331 = vadd.f32 %v321, %v329
        %v332 = vadd.f32 %v322, %v330
        %333 = vset.pattern.permute.xlu0 2
        %334 = vperm.xlu0 %333, %v304
        %v335 = vpop.permute.xlu0 %334
        %v337 = vperm.slane %v302, 2
        %v338 = vperm.slane %v303, 2
        %v339 = vmul.f32 %v335, %v337
        %v340 = vmul.f32 %v335, %v338
        %v341 = vadd.f32 %v331, %v339
        %v342 = vadd.f32 %v332, %v340
        %343 = vset.pattern.permute.xlu0 3
        %344 = vperm.xlu0 %343, %v304
        %v345 = vpop.permute.xlu0 %344
        %v347 = vperm.slane %v302, 3
        %v348 = vperm.slane %v303, 3
        %v349 = vmul.f32 %v345, %v347
        %v350 = vmul.f32 %v345, %v348
        %v351 = vadd.f32 %v341, %v349
        %v352 = vadd.f32 %v342, %v350
        %353 = vset.pattern.permute.xlu0 4
        %354 = vperm.xlu0 %353, %v304
        %v355 = vpop.permute.xlu0 %354
        %v357 = vperm.slane %v302, 4
        %v358 = vperm.slane %v303, 4
        %v359 = vmul.f32 %v355, %v357
        %v360 = vmul.f32 %v355, %v358
        %v361 = vadd.f32 %v351, %v359
        %v362 = vadd.f32 %v352, %v360
        %363 = vset.pattern.permute.xlu0 5
        %364 = vperm.xlu0 %363, %v304
        %v365 = vpop.permute.xlu0 %364
        %v367 = vperm.slane %v302, 5
        %v368 = vperm.slane %v303, 5
        %v369 = vmul.f32 %v365, %v367
        %v370 = vmul.f32 %v365, %v368
        %v371 = vadd.f32 %v361, %v369
        %v372 = vadd.f32 %v362, %v370
        %v373 = vtanh.pop %v371
        %v374 = vtanh.pop %v372
        %v375 = vmul.f32 %v373, 3.4965
        %v376 = vmul.f32 %v374, 3.4965
        %v377 = vsub.f32 %v375, 0.5
        %v378 = vsub.f32 %v376, 0.5
        %v379 = vround.ne.pseudo %v377
        %v380 = vround.ne.pseudo %v378
        %v381 = vsub.f32 %v379, %v377
        %v382 = vsub.f32 %v380, %v378
        %v383 = vmul.f32 %v381, %v381
        %v384 = vmul.f32 %v382, %v382
        %vm385 = vcmask 1043456
        %v386 = vsel %vm385, %v383, 0.0
        %v387 = vsel %vm385, %v384, 0.0
        %v388 = vadd.f32 %v386, %v387
        %389 = vadd.xlane.f32.xlu0 %v388
        %v390 = vpop.xlane.xlu0 %389
        %v391 = vrot.slane %v390, 4
        %v392 = vadd.f32 %v390, %v391
        %v393 = vrot.slane %v392, 2
        %v394 = vadd.f32 %v392, %v393
        %v395 = vrot.slane %v394, 1
        %v396 = vadd.f32 %v394, %v395
        %s397 = vtos %v396
        %v398 = vstv %s397
        %p399 = scmp.eq.s32.totalorder %s26, 0
        // Predicated region
        $region41: #{tpu_custom_call.1} parent=39 // pred_check
          %p400 = pneg %p399
        $region42: #{tpu_custom_call.1} parent=39 // pred_check_branch
          %402 = sbr.rel (%p400) target = $region44
        $region43: #{tpu_custom_call.1} parent=39 // pred_region
          %403 = vst [vmem:[%s281] sm:$0xff] 0.0
        $region44: #{tpu_custom_call.1} parent=39 // pred_fallthru
          _
        %v404 = vld [vmem:[%s281] sm:$0xff]
        %v405 = vadd.f32 %v404, %v398
        %406 = vst [vmem:[%s281] sm:$0xff] %v405
        %v407 = vld [vmem:[%s4] sm:$0x3f]
        %409 = vset.pattern.permute.xlu0 0
        %410 = vperm.xlu0 %409, %v407
        %v411 = vpop.permute.xlu0 %410
        %414 = vset.pattern.permute.xlu0 0
        %415 = vperm.xlu0 %414, %v305
        %v416 = vpop.permute.xlu0 %415
        %v418 = vperm.slane %v379, 0
        %v419 = vperm.slane %v380, 0
        %v420 = vmul.f32 %v416, %v418
        %v421 = vmul.f32 %v416, %v419
        %v422 = vadd.f32 %v411, %v420
        %v423 = vadd.f32 %v411, %v421
        %424 = vset.pattern.permute.xlu0 1
        %425 = vperm.xlu0 %424, %v305
        %v426 = vpop.permute.xlu0 %425
        %v428 = vperm.slane %v379, 1
        %v429 = vperm.slane %v380, 1
        %v430 = vmul.f32 %v426, %v428
        %v431 = vmul.f32 %v426, %v429
        %v432 = vadd.f32 %v422, %v430
        %v433 = vadd.f32 %v423, %v431
        %434 = vset.pattern.permute.xlu0 2
        %435 = vperm.xlu0 %434, %v305
        %v436 = vpop.permute.xlu0 %435
        %v438 = vperm.slane %v379, 2
        %v439 = vperm.slane %v380, 2
        %v440 = vmul.f32 %v436, %v438
        %v441 = vmul.f32 %v436, %v439
        %v442 = vadd.f32 %v432, %v440
        %v443 = vadd.f32 %v433, %v441
        %444 = vset.pattern.permute.xlu0 3
        %445 = vperm.xlu0 %444, %v305
        %v446 = vpop.permute.xlu0 %445
        %v448 = vperm.slane %v379, 3
        %v449 = vperm.slane %v380, 3
        %v450 = vmul.f32 %v446, %v448
        %v451 = vmul.f32 %v446, %v449
        %v452 = vadd.f32 %v442, %v450
        %v453 = vadd.f32 %v443, %v451
        %454 = vst [vmem:[%s300] sm:$0x3f] %v452
        %455 = vst [vmem:[%s300 + $0x8] sm:$0x3f] %v453
        %s456 = smul.u32 2, %s26
        %p457 = scmp.lt.s32.totalorder %s25, 1
        %s458 = scalar_select %p457, %s25, 1
        %p459 = scmp.lt.s32.totalorder %s456, 1
        %s460 = scalar_select %p459, %s456, 1
        %s461 = smul.addr %s458, 2
        %s462 = sadd.s32 %s460, %s461
        %s463 = smul.addr %s462, 8
        %s464 = scalar_lea.vmem %s5, %s463
        %s465 = sand.u32 %s181, 1
        %s466 = scalar_lea.sflag [#allocation3], %s465
        %s467 = sand.u32 %s181, 1
        %s468 = smul.addr %s467, 8
        %s469 = scalar_lea.vmem [#allocation2], %s468
        // Predicated region
        $region45: #{tpu_custom_call.1} parent=39 // pred_check
          %p470 = pneg %p165
        $region46: #{tpu_custom_call.1} parent=39 // pred_check_branch
          %472 = sbr.rel (%p470) target = $region48
        $region47: #{tpu_custom_call.1} parent=39 // pred_region
          %s473 = smul.u32 2, %s26
        $region48: #{tpu_custom_call.1} parent=39 // pred_fallthru
          _
        // Predicated region
        $region49: #{tpu_custom_call.1} parent=39 // pred_check
          %p474 = pneg %p191
        $region50: #{tpu_custom_call.1} parent=39 // pred_check_branch
          %476 = sbr.rel (%p474) target = $region52
        $region51: #{tpu_custom_call.1} parent=39 // pred_region
          %478 = vsyncadd %s466, 0
          %s479 = smul.addr %s25, 8
          %s480 = scalar_lea.hbm %s6, %s479
          %s482 = sshll.u32 %s469, 4
          %s483 = int_to_ptr.vmem [resolvable:$true] %s482
          %s484 = sshll.u32 %s480, 4
          %s485 = int_to_ptr.hbm [resolvable:$true] %s484
          %487 = dma.vmem_to_hbm [thread:$0]  %s483, 128, %s485, %s466
        $region52: #{tpu_custom_call.1} parent=39 // pred_fallthru
          _
      $region40: #{tpu_custom_call.1} parent=5 // pred_fallthru
        _
      %p488 = scmp.le.s32.totalorder 2, %s16
      // Predicated region
      $region53: #{tpu_custom_call.1} parent=5 // pred_check
        %p489 = pneg %p488
      $region54: #{tpu_custom_call.1} parent=5 // pred_check_branch
        %491 = sbr.rel (%p489) target = $region56
      $region55: #{tpu_custom_call.1} parent=5 // pred_region
        %s492 = ssub.s32 %s16, 2
        // Predicated region
        $region57: #{tpu_custom_call.1} parent=55 // pred_check
          %p493 = pneg %p171
        $region58: #{tpu_custom_call.1} parent=55 // pred_check_branch
          %495 = sbr.rel (%p493) target = $region60
        $region59: #{tpu_custom_call.1} parent=55 // pred_region
          %s496 = smul.u32 2, %s28
          %p497 = scmp.lt.s32.totalorder %s27, 1
          %s498 = scalar_select %p497, %s27, 1
          %p499 = scmp.lt.s32.totalorder %s496, 1
          %s500 = scalar_select %p499, %s496, 1
          %s501 = smul.addr %s498, 2
          %s502 = sadd.s32 %s500, %s501
          %s503 = smul.addr %s502, 8
          %s504 = scalar_lea.vmem %s5, %s503
        $region60: #{tpu_custom_call.1} parent=55 // pred_fallthru
          _
        // Predicated region
        $region61: #{tpu_custom_call.1} parent=55 // pred_check
          %p505 = pneg %p197
        $region62: #{tpu_custom_call.1} parent=55 // pred_check_branch
          %507 = sbr.rel (%p505) target = $region64
        $region63: #{tpu_custom_call.1} parent=55 // pred_region
          %s508 = sand.u32 %s182, 1
          %s509 = scalar_lea.sflag [#allocation3], %s508
          %s510 = sand.u32 %s182, 1
          %s511 = smul.addr %s510, 8
          %s512 = scalar_lea.vmem [#allocation2], %s511
          %514 = dma.done %s509, 128
        $region64: #{tpu_custom_call.1} parent=55 // pred_fallthru
          _
      $region56: #{tpu_custom_call.1} parent=5 // pred_fallthru
        _
    $region6: #{tpu_custom_call.1} parent=1 // loop_footer
      %s20 = sadd.s32 1, %s16
    $region7: #{tpu_custom_call.1} parent=1 // loop_footer_branch
      %15 = sbr.rel target = $region3
    $region8: #{tpu_custom_call.1} parent=1 // loop_exit
      _
    %515 = vsyncpa [#allocation3], 1
    %s516 = scalar_lea.sflag [#allocation3], 1
    %517 = vsyncpa %s516, 1

</llo_original>
